<compile_context>
chip_gen: v6e
topology: v6e:2x2x1
jax: 0.10.0
libtpu: 0.0.40
codegen_flags: <defaults>
</compile_context>

<pallas_src>
import functools

import numpy as np
import jax
import jax.numpy as jnp
from jax.experimental import pallas as pl
from jax.experimental.pallas import tpu as pltpu


def build_ibwdct_weight() -> np.ndarray:
    """DCT basis W[c, k], c = p*8+q (input channel), k = m*8+n (pixel in 8x8 block).

    Matches ConvTranspose2d(64, 1, 8, 8).weight[p*8+q, 0, m, n].
    """
    w = np.zeros((8, 8, 8, 8), dtype=np.float64)  # [p, q, m, n]
    for m in range(8):
        for n in range(8):
            for p in range(8):
                for q in range(8):
                    w[p, q, m, n] = (
                        np.cos(np.pi * (2 * m + 1) * p / 16)
                        * np.cos(np.pi * (2 * n + 1) * q / 16)
                        * (np.sqrt(1 / 8) if p == 0 else 1 / 2)
                        * (np.sqrt(1 / 8) if q == 0 else 1 / 2)
                    )
    return w.reshape(64, 64).astype(np.float32)  # [c, k]


def _ibwdct_kernel(w_ref, x_ref, o_ref, *, bn):
    # w_ref: (64, 64) = Wdct^T (k, c); x_ref / o_ref: (bn, 64, ts) channel-major tiles.
    # bn is a small static int -> unrolled loop of lane-dense MXU matmuls.
    w = w_ref[...]
    for b in range(bn):
        o_ref[b, :, :] = jnp.dot(
            w, x_ref[b, :, :], preferred_element_type=jnp.float32
        ).astype(o_ref.dtype)


def _choose_tiling(N, S, *, max_elems=16384, max_bn=32, min_steps=8):
    """Pick (bn, ts): batch-fold factor and lane-dense spatial tile."""
    if S <= max_elems:
        ts = S                                  # full-extent block: always legal
        bn = max(1, min(N, max_bn, max_elems // max(S, 1)))
    else:
        ts = (max_elems // 128) * 128           # multiple of 128, ragged tail clipped
        bn = 1
    # bn must divide N so batch blocks are never ragged.
    while N % bn:
        bn -= 1

    def steps(b, t):
        return pl.cdiv(N, b) * pl.cdiv(S, t)

    # Keep enough grid steps for megacore / v7x 2-TC sharding.
    while bn > 1 and steps(bn, ts) < min_steps:
        bn = max(1, bn // 2)
    while N % bn:
        bn -= 1
    while ts >= 1024 and ts % 256 == 0 and steps(bn, ts) < min_steps:
        ts //= 2
    return bn, ts


def ibwdct(x: jax.Array, w_kc: jax.Array) -> jax.Array:
    """x: (N, 64, H, W) float32 -> (N, 1, 8H, 8W) float32.  w_kc: (64, 64) = Wdct^T."""
    N, C, H, W = x.shape
    assert C == 64
    S = H * W
    x_flat = x.reshape(N, C, S)  # free reshape of contiguous NCHW

    bn, ts = _choose_tiling(N, S)
    grid = (pl.cdiv(N, bn), pl.cdiv(S, ts))

    y = pl.pallas_call(
        functools.partial(_ibwdct_kernel, bn=bn),
        out_shape=jax.ShapeDtypeStruct((N, 64, S), jnp.float32),
        grid_spec=pltpu.PrefetchScalarGridSpec(
            num_scalar_prefetch=0,
            grid=grid,
            in_specs=[
                # Constant block index -> weight stays resident in VMEM for all steps.
                pl.BlockSpec((64, 64), lambda i, j: (0, 0)),
                # Channel-major (bn, 64, ts) tile of x (lane dim = ts, contiguous DMA).
                pl.BlockSpec((bn, 64, ts), lambda i, j: (i, 0, j)),
            ],
            out_specs=pl.BlockSpec((bn, 64, ts), lambda i, j: (i, 0, j)),
        ),
        compiler_params=pltpu.CompilerParams(
            dimension_semantics=("parallel", "parallel"),
            # 2 streams x double-buffered 4 MiB tiles ~= 16 MiB; raise above v5e's
            # 16 MiB scoped default, still well under every generation's physical VMEM.
            vmem_limit_bytes=32 * 1024 * 1024,
        ),
    )(w_kc, x_flat)

    # Depth-to-space: (N, 64, H*W) -> (N, 1, 8H, 8W).
    # TODO(synk): fuse this 8x8 pixel-shuffle into the kernel (needs an in-kernel
    # lane/sublane relayout with uncertain Mosaic support); costs one XLA transpose pass.
    y = y.reshape(N, 8, 8, H, W).transpose(0, 3, 1, 4, 2).reshape(N, 1, 8 * H, 8 * W)
    return y


def _reference(x, w_ck):
    N, _, H, W = x.shape
    t = jnp.einsum("nchw,ck->nhwk", x, w_ck).reshape(N, H, W, 8, 8)
    return jnp.transpose(t, (0, 1, 3, 2, 4)).reshape(N, 1, 8 * H, 8 * W)


if __name__ == "__main__":
    key = jax.random.PRNGKey(0)

    w_ck_np = build_ibwdct_weight()                      # (c, k), ConvTranspose2d layout
    w_kc = jnp.asarray(np.ascontiguousarray(w_ck_np.T))  # (k, c) for y = W^T @ x
    w_ck = jnp.asarray(w_ck_np)

    run = jax.jit(ibwdct)

    # Small canonical test: (2, 64, 16, 16) DCT coefficients -> (2, 1, 128, 128) image.
    k1, k2 = jax.random.split(key)
    x_small = jax.random.normal(k1, (2, 64, 16, 16), dtype=jnp.float32)
    y_small = jax.block_until_ready(run(x_small, w_kc))
    assert y_small.shape == (2, 1, 128, 128)
    np.testing.assert_allclose(
        np.asarray(y_small), np.asarray(_reference(x_small, w_ck)), rtol=1e-4, atol=1e-4
    )

    # Larger batch: exercises the batch-folding path (bn > 1 blocks, multi-step grid).
    x_big = jax.random.normal(k2, (16, 64, 16, 16), dtype=jnp.float32)
    y_big = jax.block_until_ready(run(x_big, w_kc))
    assert y_big.shape == (16, 1, 128, 128)
    np.testing.assert_allclose(
        np.asarray(y_big), np.asarray(_reference(x_big, w_ck)), rtol=1e-4, atol=1e-4
    )

    print("KERNEL_OK")
</pallas_src>

<mosaic_0001>
module attributes {stable_mosaic.version = 11 : i64} {
  func.func @_ibwdct_kernel(%arg0: i32, %arg1: i32, %arg2: memref<64x64xf32, #tpu.memory_space<vmem>>, %arg3: memref<1x64x256xf32, #tpu.memory_space<vmem>>, %arg4: memref<1x64x256xf32, #tpu.memory_space<vmem>>) attributes {dimension_semantics = [#tpu.dimension_semantics<parallel>, #tpu.dimension_semantics<parallel>], iteration_bounds = array<i64: 2, 1>, scalar_prefetch = 0 : i64, scratch_operands = 0 : i64, tpu.core_type = #tpu.core_type<tc>, window_params = [{pipeline_mode = #tpu.pipeline_mode<synchronous>, transform_indices = @transform_0, window_bounds = array<i64: 64, 64>}, {transform_indices = @transform_1, window_bounds = array<i64: 1, 64, 256>}, {transform_indices = @transform_2, window_bounds = array<i64: 1, 64, 256>}]} {
    %c0 = arith.constant 0 : index
    %c0_0 = arith.constant 0 : index
    %0 = vector.load %arg2[%c0, %c0_0] : memref<64x64xf32, #tpu.memory_space<vmem>>, vector<64x64xf32>
    %c0_1 = arith.constant 0 : index
    %c0_2 = arith.constant 0 : index
    %c0_3 = arith.constant 0 : index
    %1 = vector.load %arg3[%c0_1, %c0_2, %c0_3] : memref<1x64x256xf32, #tpu.memory_space<vmem>>, vector<1x64x256xf32>
    %2 = vector.shape_cast %1 : vector<1x64x256xf32> to vector<64x256xf32>
    %cst = arith.constant dense<0.000000e+00> : vector<64x256xf32>
    %3 = tpu.matmul %0, %2, %cst {dimension_numbers = #tpu.dot_dimension_numbers<[1], [0], [0], [1], [0, 0, 1, 1], [], []>} : vector<64x64xf32>, vector<64x256xf32>, vector<64x256xf32> -> vector<64x256xf32>
    %c0_4 = arith.constant 0 : index
    %c0_5 = arith.constant 0 : index
    %c0_6 = arith.constant 0 : index
    %4 = vector.load %arg4[%c0_4, %c0_5, %c0_6] : memref<1x64x256xf32, #tpu.memory_space<vmem>>, vector<1x64x256xf32>
    %5 = vector.shape_cast %4 : vector<1x64x256xf32> to vector<64x256xf32>
    %6 = vector.shape_cast %3 : vector<64x256xf32> to vector<1x64x256xf32>
    tpu.vector_store %arg4[%c0_4, %c0_5, %c0_6], %6 {strides = array<i32>} : memref<1x64x256xf32, #tpu.memory_space<vmem>>, vector<1x64x256xf32>,
    return
  }
  func.func @transform_0(%arg0: i32, %arg1: i32) -> (i32, i32) {
    %c0_i32 = arith.constant 0 : i32
    %c0_i32_0 = arith.constant 0 : i32
    %c0_i32_1 = arith.constant 0 : i32
    return %c0_i32, %c0_i32_0 : i32, i32
  }
  func.func @transform_1(%arg0: i32, %arg1: i32) -> (i32, i32, i32) {
    %c0_i32 = arith.constant 0 : i32
    %c0_i32_0 = arith.constant 0 : i32
    return %arg0, %c0_i32, %arg1 : i32, i32, i32
  }
  func.func @transform_2(%arg0: i32, %arg1: i32) -> (i32, i32, i32) {
    %c0_i32 = arith.constant 0 : i32
    %c0_i32_0 = arith.constant 0 : i32
    return %arg0, %c0_i32, %arg1 : i32, i32, i32
  }
}

</mosaic_0001>

<llo_original>
// kernel: ibwdct.1
$region0: #{ibwdct.1}
  #allocation0 [shape = 'u32[]', space=smem, size = 0x4, offset = 0x4, fixed_abs, tag = 'smem constant byte address 0x4 - core index']
  #allocation1 [shape = 'u32[144,128]{1,0:T(1,128)}', space=vmem, size = 0x12000, scoped, tag = 'internal scratch']
  %s0 = inlined_call_operand.hbm [shape: f32[64,64], index: 0, kind: input, shape index: {}]
  %s1 = inlined_call_operand.vmem [shape: f32[2,64,256], index: 1, kind: input, shape index: {}]
  %s2 = inlined_call_operand.vmem [shape: f32[2,64,256], index: 2, kind: output, shape index: {}]
  %s3 = sld [smem:[#allocation0]]
  $region45: #{ibwdct.1} parent=0
    _
  %s5 = ssub.s32 1, %s3
  %s6 = scalar_select 0, %s5, %s3
  $region1: #{ibwdct.1} parent=0
    #allocation2 [shape = 'u8[32768]{0}', space=vmem, size = 0x8000, scoped, tag = 'input window, operand 0, single buffered']
    #allocation3 [shape = 's32[2]{0}', space=sflag, size = 0x8, scoped, tag = 'scoped memory for ibwdct.1']
    %7 = vsyncpa [#allocation3], 0
    loop: start=0, step=1, limit=4
    $region2: #{ibwdct.1} parent=1 // loop_pre_header
      _
    $region3: #{ibwdct.1} parent=1 // loop_header
      %s9 = sphi 0, %s13
      %p10 = scmp.ge.s32.totalorder %s9, 4
      %s16 = sphi 0, %s28
      %s17 = sphi 0, %s24
      %s18 = sphi 0, %s16
      %s19 = sphi 0, %s17
      %s20 = sphi 0, %s18
      %s21 = sphi 0, %s19
      %s29 = sphi 0, %s29
      %s31 = sphi 0, %s29
      %s32 = sphi 0, %s31
      %s46 = sphi 0, %s32
      %s54 = sphi 0, %s56
      %s57 = sphi 0, %s54
      %s58 = sphi 0, %s57
      %s74 = sphi 0, %s58
      %s82 = sphi 0, %s84
      %s85 = sphi 0, %s82
      %s86 = sphi 0, %s85
      %s102 = sphi 0, %s86
    $region4: #{ibwdct.1} parent=1 // loop_header_branch
      %12 = sbr.rel (%p10) target = $region8
    $region5: #{ibwdct.1} parent=1 // loop_body
      %s14 = ssub.s32 %s9, 1
      %s15 = ssub.s32 %s9, 2
      %s22 = sadd.s32 1, %s17
      %p23 = scmp.ge.s32.totalorder %s22, 1
      %s24 = scalar_select %p23, 0, %s22
      %s25 = sadd.s32 1, %s16
      %s26 = scalar_select %p23, %s25, %s16
      %p27 = scmp.ge.s32.totalorder %s26, 2
      %s28 = scalar_select %p27, 0, %s26
      %s30 = sadd.s32 %s29, 1
      %p33 = scmp.eq.s32.totalorder %s9, 1
      %p34 = scmp.ne.s32.totalorder %s29, %s31
      %p35 = scmp.eq.s32.totalorder %s9, 0
      %p36 = por %p34, %p35
      %p37 = scmp.ne.s32.totalorder %s29, %s31
      %p38 = scmp.eq.s32.totalorder %s14, 1
      %p39 = por %p37, %p38
      %p40 = scmp.ne.s32.totalorder %s31, %s32
      %p41 = scmp.eq.s32.totalorder %s14, 0
      %p42 = por %p40, %p41
      %p43 = scmp.ne.s32.totalorder %s31, %s32
      %p44 = scmp.eq.s32.totalorder %s15, 1
      %p45 = por %p43, %p44
      %p47 = scmp.ne.s32.totalorder %s32, %s46
      %p48 = scmp.eq.s32.totalorder %s15, 0
      %p49 = por %p47, %p48
      %s50 = ssub.s32 %s16, %s28
      %s51 = ssub.s32 %s17, %s24
      %s52 = sor.u32 %s50, %s51
      %p53 = scmp.eq.s32.totalorder %s52, 0
      %s55 = sadd.s32 %s54, 1
      %s56 = scalar_select %p53, %s54, %s55
      %p59 = pneg %p53
      %p60 = scmp.eq.s32.totalorder %s9, 1
      %p61 = por %p59, %p60
      %p62 = scmp.ne.s32.totalorder %s54, %s57
      %p63 = scmp.eq.s32.totalorder %s9, 0
      %p64 = por %p62, %p63
      %p65 = scmp.ne.s32.totalorder %s54, %s57
      %p66 = scmp.eq.s32.totalorder %s14, 1
      %p67 = por %p65, %p66
      %p68 = scmp.ne.s32.totalorder %s57, %s58
      %p69 = scmp.eq.s32.totalorder %s14, 0
      %p70 = por %p68, %p69
      %p71 = scmp.ne.s32.totalorder %s57, %s58
      %p72 = scmp.eq.s32.totalorder %s15, 1
      %p73 = por %p71, %p72
      %p75 = scmp.ne.s32.totalorder %s58, %s74
      %p76 = scmp.eq.s32.totalorder %s15, 0
      %p77 = por %p75, %p76
      %s78 = ssub.s32 %s16, %s28
      %s79 = ssub.s32 %s17, %s24
      %s80 = sor.u32 %s78, %s79
      %p81 = scmp.eq.s32.totalorder %s80, 0
      %s83 = sadd.s32 %s82, 1
      %s84 = scalar_select %p81, %s82, %s83
      %p87 = pneg %p81
      %p88 = scmp.eq.s32.totalorder %s9, 1
      %p89 = por %p87, %p88
      %p90 = scmp.ne.s32.totalorder %s82, %s85
      %p91 = scmp.eq.s32.totalorder %s9, 0
      %p92 = por %p90, %p91
      %p93 = scmp.ne.s32.totalorder %s82, %s85
      %p94 = scmp.eq.s32.totalorder %s14, 1
      %p95 = por %p93, %p94
      %p96 = scmp.ne.s32.totalorder %s85, %s86
      %p97 = scmp.eq.s32.totalorder %s14, 0
      %p98 = por %p96, %p97
      %p99 = scmp.ne.s32.totalorder %s85, %s86
      %p100 = scmp.eq.s32.totalorder %s15, 1
      %p101 = por %p99, %p100
      %p103 = scmp.ne.s32.totalorder %s86, %s102
      %p104 = scmp.eq.s32.totalorder %s15, 0
      %p105 = por %p103, %p104
      %p106 = scmp.le.s32.totalorder 1, %s9
      %p107 = scmp.lt.s32.totalorder %s9, 3
      %p108 = pnand %p106, %p107
      %p109 = pneg %p108
      // Predicated region
      $region9: #{ibwdct.1} parent=5 // pred_check
        _
      $region10: #{ibwdct.1} parent=5 // pred_check_branch
        %111 = sbr.rel (%p108) target = $region12
      $region11: #{ibwdct.1} parent=5 // pred_region
        %s112 = ssub.s32 %s9, 1
        // Predicated region
        $region13: #{ibwdct.1} parent=11 // pred_check
          %p113 = pneg %p42
        $region14: #{ibwdct.1} parent=11 // pred_check_branch
          %115 = sbr.rel (%p113) target = $region16
        $region15: #{ibwdct.1} parent=11 // pred_region
          %s117 = ssub.s32 1024, 1024
          %118 = vsyncadd [#allocation3], %s117
          %s119 = sshll.u32 [#allocation2], 4
          %s120 = int_to_ptr.vmem [resolvable:$true] %s119
          %125 = dma.hbm_to_vmem [thread:$0]  %s0, 1024, %s120, [#allocation3], 128, 128, 8
        $region16: #{ibwdct.1} parent=11 // pred_fallthru
          _
      $region12: #{ibwdct.1} parent=5 // pred_fallthru
        _
      %p126 = scmp.lt.s32.totalorder %s9, 2
      // Predicated region
      $region17: #{ibwdct.1} parent=5 // pred_check
        %p127 = pneg %p126
      $region18: #{ibwdct.1} parent=5 // pred_check_branch
        %129 = sbr.rel (%p127) target = $region20
      $region19: #{ibwdct.1} parent=5 // pred_region
        // Predicated region
        $region21: #{ibwdct.1} parent=19 // pred_check
          %p130 = pneg %p64
        $region22: #{ibwdct.1} parent=19 // pred_check_branch
          %132 = sbr.rel (%p130) target = $region24
        $region23: #{ibwdct.1} parent=19 // pred_region
          %s133 = smul.u32 2, %s17
          %p134 = scmp.lt.s32.totalorder %s16, 1
          %s135 = scalar_select %p134, %s16, 1
          %p136 = scmp.lt.s32.totalorder %s133, 1
          %s137 = scalar_select %p136, %s133, 1
          %s138 = smul.addr %s135, 16
          %s139 = sadd.s32 %s137, %s138
          %s140 = smul.addr %s139, 8
          %s141 = scalar_lea.vmem %s1, %s140
          %s142 = smul.u32 2, %s17
        $region24: #{ibwdct.1} parent=19 // pred_fallthru
          _
      $region20: #{ibwdct.1} parent=5 // pred_fallthru
        _
      %p143 = scmp.le.s32.totalorder 1, %s9
      %p144 = scmp.lt.s32.totalorder %s9, 3
      %p145 = pnand %p143, %p144
      %p146 = pneg %p145
      // Predicated region
      $region25: #{ibwdct.1} parent=5 // pred_check
        _
      $region26: #{ibwdct.1} parent=5 // pred_check_branch
        %148 = sbr.rel (%p145) target = $region28
      $region27: #{ibwdct.1} parent=5 // pred_region
        %s149 = ssub.s32 %s9, 1
        // Predicated region
        $region29: #{ibwdct.1} parent=27 // pred_check
          %p150 = pneg %p42
        $region30: #{ibwdct.1} parent=27 // pred_check_branch
          %152 = sbr.rel (%p150) target = $region32
        $region31: #{ibwdct.1} parent=27 // pred_region
          %153 = dma.done [#allocation3], 1024
        $region32: #{ibwdct.1} parent=27 // pred_fallthru
          _
        %p154 = pneg %p42
        %p155 = pneg %p39
        %s156 = smul.u32 2, %s19
        %p157 = scmp.lt.s32.totalorder %s18, 1
        %s158 = scalar_select %p157, %s18, 1
        %p159 = scmp.lt.s32.totalorder %s156, 1
        %s160 = scalar_select %p159, %s156, 1
        %s161 = smul.addr %s158, 16
        %s162 = sadd.s32 %s160, %s161
        %s163 = smul.addr %s162, 8
        %s164 = scalar_lea.vmem %s1, %s163
        %p165 = pneg %p70
        %p166 = pneg %p67
        %p167 = pneg %p98
        %p168 = pneg %p95
        %s169 = smul.u32 2, %s19
        %p170 = scmp.lt.s32.totalorder %s18, 1
        %s171 = scalar_select %p170, %s18, 1
        %p172 = scmp.lt.s32.totalorder %s169, 1
        %s173 = scalar_select %p172, %s169, 1
        %s174 = smul.addr %s171, 16
        %s175 = sadd.s32 %s173, %s174
        %s176 = smul.addr %s175, 8
        %s177 = scalar_lea.vmem %s2, %s176
        %s178 = smul.u32 2, %s19
        %p179 = scmp.lt.s32.totalorder %s18, 1
        %s180 = scalar_select %p179, %s18, 1
        %p181 = scmp.lt.s32.totalorder %s178, 1
        %s182 = scalar_select %p181, %s178, 1
        %s183 = smul.addr %s180, 16
        %s184 = sadd.s32 %s182, %s183
        %s185 = smul.addr %s184, 8
        %s186 = scalar_lea.vmem %s1, %s185
        %s187 = smul.u32 2, %s19
        %s188 = smul.u32 2, %s19
        %p189 = scmp.lt.s32.totalorder %s18, 1
        %s190 = scalar_select %p189, %s18, 1
        %p191 = scmp.lt.s32.totalorder %s188, 1
        %s192 = scalar_select %p191, %s188, 1
        %s193 = smul.addr %s190, 16
        %s194 = sadd.s32 %s192, %s193
        %s195 = smul.addr %s194, 8
        %s196 = scalar_lea.vmem %s2, %s195
        %s197 = smul.u32 2, %s19
        %v198 = vld [vmem:[#allocation2] sm:$0xff]
        %v199 = vld [vmem:[#allocation2 + $0x8] sm:$0xff]
        %v200 = vld [vmem:[#allocation2 + $0x10] sm:$0xff]
        %v201 = vld [vmem:[#allocation2 + $0x18] sm:$0xff]
        %v202 = vld [vmem:[#allocation2 + $0x20] sm:$0xff]
        %v203 = vld [vmem:[#allocation2 + $0x28] sm:$0xff]
        %v204 = vld [vmem:[#allocation2 + $0x30] sm:$0xff]
        %v205 = vld [vmem:[#allocation2 + $0x38] sm:$0xff]
        %v206 = vld [vmem:[%s186] sm:$0xff]
        %v207 = vld [vmem:[%s186 + $0x8] sm:$0xff]
        %v208 = vld [vmem:[%s186 + $0x10] sm:$0xff]
        %v209 = vld [vmem:[%s186 + $0x18] sm:$0xff]
        %v210 = vld [vmem:[%s186 + $0x20] sm:$0xff]
        %v211 = vld [vmem:[%s186 + $0x28] sm:$0xff]
        %v212 = vld [vmem:[%s186 + $0x30] sm:$0xff]
        %v213 = vld [vmem:[%s186 + $0x38] sm:$0xff]
        %v214 = vld [vmem:[%s186 + $0x40] sm:$0xff]
        %v215 = vld [vmem:[%s186 + $0x48] sm:$0xff]
        %v216 = vld [vmem:[%s186 + $0x50] sm:$0xff]
        %v217 = vld [vmem:[%s186 + $0x58] sm:$0xff]
        %v218 = vld [vmem:[%s186 + $0x60] sm:$0xff]
        %v219 = vld [vmem:[%s186 + $0x68] sm:$0xff]
        %v220 = vld [vmem:[%s186 + $0x70] sm:$0xff]
        %v221 = vld [vmem:[%s186 + $0x78] sm:$0xff]
        %vm222 = vcmask 523264
        %v224 = vsel %vm222, %v198, 0
        %v227 = vsel %vm222, %v199, 0
        %v230 = vsel %vm222, %v200, 0
        %v233 = vsel %vm222, %v201, 0
        %v236 = vsel %vm222, %v202, 0
        %v239 = vsel %vm222, %v203, 0
        %v242 = vsel %vm222, %v204, 0
        %v245 = vsel %vm222, %v205, 0
        %247 = vmatprep.subr.mxu0 0.0
        %248 = vmatpush1.msra.mxu0 0.0
        %249 = vmatprep.subr.mxu0 0.0
        %250 = vmatpush1.msra.mxu0 0.0
        %251 = vmatprep.subr.mxu0 0.0
        %252 = vmatpush1.msra.mxu0 0.0
        %253 = vmatprep.subr.mxu0 0.0
        %254 = vmatpush1.msra.mxu0 0.0
        %255 = vmatprep.subr.mxu0 0.0
        %256 = vmatpush1.msra.mxu0 0.0
        %257 = vmatprep.subr.mxu0 0.0
        %258 = vmatpush1.msra.mxu0 0.0
        %259 = vmatprep.subr.mxu0 0.0
        %260 = vmatpush1.msra.mxu0 0.0
        %261 = vmatprep.subr.mxu0 0.0
        %262 = vmatpush1.msra.mxu0 0.0
        %263 = vmatprep.subr.mxu0 %v221
        %264 = vmatpush1.msra.mxu0 %v220
        %265 = vmatprep.subr.mxu0 %v219
        %266 = vmatpush1.msra.mxu0 %v218
        %267 = vmatprep.subr.mxu0 %v217
        %268 = vmatpush1.msra.mxu0 %v216
        %269 = vmatprep.subr.mxu0 %v215
        %270 = vmatpush1.msra.mxu0 %v214
        %271 = vmatprep.subr.mxu0 %v213
        %272 = vmatpush1.msra.mxu0 %v212
        %273 = vmatprep.subr.mxu0 %v211
        %274 = vmatpush1.msra.mxu0 %v210
        %275 = vmatprep.subr.mxu0 %v209
        %276 = vmatpush1.msra.mxu0 %v208
        %277 = vmatprep.subr.mxu0 %v207
        %278 = vmatpush1.msra.mxu0 %v206
        %279 = vmatprep.subr.mxu0 0.0
        %280 = vmatpush2.msra.mxu0 0.0
        %281 = vmatprep.subr.mxu0 0.0
        %282 = vmatpush2.msra.mxu0 0.0
        %283 = vmatprep.subr.mxu0 0.0
        %284 = vmatpush2.msra.mxu0 0.0
        %285 = vmatprep.subr.mxu0 0.0
        %286 = vmatpush2.msra.mxu0 0.0
        %287 = vmatprep.subr.mxu0 0.0
        %288 = vmatpush2.msra.mxu0 0.0
        %289 = vmatprep.subr.mxu0 0.0
        %290 = vmatpush2.msra.mxu0 0.0
        %291 = vmatprep.subr.mxu0 0.0
        %292 = vmatpush2.msra.mxu0 0.0
        %293 = vmatprep.subr.mxu0 0.0
        %294 = vmatpush2.msra.mxu0 0.0
        %295 = vmatprep.subr.mxu0 0.0
        %296 = vmatpush2.msra.mxu0 0.0
        %297 = vmatprep.subr.mxu0 0.0
        %298 = vmatpush2.msra.mxu0 0.0
        %299 = vmatprep.subr.mxu0 0.0
        %300 = vmatpush2.msra.mxu0 0.0
        %301 = vmatprep.subr.mxu0 0.0
        %302 = vmatpush2.msra.mxu0 0.0
        %303 = vmatprep.subr.mxu0 0.0
        %304 = vmatpush2.msra.mxu0 0.0
        %305 = vmatprep.subr.mxu0 0.0
        %306 = vmatpush2.msra.mxu0 0.0
        %307 = vmatprep.subr.mxu0 0.0
        %308 = vmatpush2.msra.mxu0 0.0
        %309 = vmatprep.subr.mxu0 0.0
        %310 = vmatpush2.msra.mxu0 0.0
        %311 = vmatprep.mubr.f32.mxu0 0.0
        %312 = vmatmul.mubr.f32.gmra.mxu0 %v224
        %v313 = vpop.f32.mrf.mxu0
        %v314 = vadd.f32 0.0, %v313
        %v315 = vpop.f32.mrf.mxu0
        %v316 = vadd.f32 0.0, %v315
        %317 = vmatprep.mubr.f32.mxu0 0.0
        %318 = vmatmul.mubr.f32.gmra.mxu0 %v227
        %v319 = vpop.f32.mrf.mxu0
        %v320 = vadd.f32 0.0, %v319
        %v321 = vpop.f32.mrf.mxu0
        %v322 = vadd.f32 0.0, %v321
        %323 = vmatprep.mubr.f32.mxu0 0.0
        %324 = vmatmul.mubr.f32.gmra.mxu0 %v230
        %v325 = vpop.f32.mrf.mxu0
        %v326 = vadd.f32 0.0, %v325
        %v327 = vpop.f32.mrf.mxu0
        %v328 = vadd.f32 0.0, %v327
        %329 = vmatprep.mubr.f32.mxu0 0.0
        %330 = vmatmul.mubr.f32.gmra.mxu0 %v233
        %v331 = vpop.f32.mrf.mxu0
        %v332 = vadd.f32 0.0, %v331
        %v333 = vpop.f32.mrf.mxu0
        %v334 = vadd.f32 0.0, %v333
        %335 = vmatprep.mubr.f32.mxu0 0.0
        %336 = vmatmul.mubr.f32.gmra.mxu0 %v236
        %v337 = vpop.f32.mrf.mxu0
        %v338 = vadd.f32 0.0, %v337
        %v339 = vpop.f32.mrf.mxu0
        %v340 = vadd.f32 0.0, %v339
        %341 = vmatprep.mubr.f32.mxu0 0.0
        %342 = vmatmul.mubr.f32.gmra.mxu0 %v239
        %v343 = vpop.f32.mrf.mxu0
        %v344 = vadd.f32 0.0, %v343
        %v345 = vpop.f32.mrf.mxu0
        %v346 = vadd.f32 0.0, %v345
        %347 = vmatprep.mubr.f32.mxu0 0.0
        %348 = vmatmul.mubr.f32.gmra.mxu0 %v242
        %v349 = vpop.f32.mrf.mxu0
        %v350 = vadd.f32 0.0, %v349
        %v351 = vpop.f32.mrf.mxu0
        %v352 = vadd.f32 0.0, %v351
        %353 = vmatprep.mubr.f32.mxu0 0.0
        %354 = vmatmul.mubr.f32.gmra.mxu0 %v245
        %v355 = vpop.f32.mrf.mxu0
        %v356 = vadd.f32 0.0, %v355
        %v357 = vpop.f32.mrf.mxu0
        %v358 = vadd.f32 0.0, %v357
        %359 = vdwg.mxu0
        %360 = vst [vmem:[%s196] sm:$0xff] %v314
        %361 = vst [vmem:[%s196 + $0x8] sm:$0xff] %v316
        %362 = vst [vmem:[%s196 + $0x10] sm:$0xff] %v320
        %363 = vst [vmem:[%s196 + $0x18] sm:$0xff] %v322
        %364 = vst [vmem:[%s196 + $0x20] sm:$0xff] %v326
        %365 = vst [vmem:[%s196 + $0x28] sm:$0xff] %v328
        %366 = vst [vmem:[%s196 + $0x30] sm:$0xff] %v332
        %367 = vst [vmem:[%s196 + $0x38] sm:$0xff] %v334
        %368 = vst [vmem:[%s196 + $0x40] sm:$0xff] %v338
        %369 = vst [vmem:[%s196 + $0x48] sm:$0xff] %v340
        %370 = vst [vmem:[%s196 + $0x50] sm:$0xff] %v344
        %371 = vst [vmem:[%s196 + $0x58] sm:$0xff] %v346
        %372 = vst [vmem:[%s196 + $0x60] sm:$0xff] %v350
        %373 = vst [vmem:[%s196 + $0x68] sm:$0xff] %v352
        %374 = vst [vmem:[%s196 + $0x70] sm:$0xff] %v356
        %375 = vst [vmem:[%s196 + $0x78] sm:$0xff] %v358
        %s376 = smul.u32 2, %s19
        %p377 = scmp.lt.s32.totalorder %s18, 1
        %s378 = scalar_select %p377, %s18, 1
        %p379 = scmp.lt.s32.totalorder %s376, 1
        %s380 = scalar_select %p379, %s376, 1
        %s381 = smul.addr %s378, 16
        %s382 = sadd.s32 %s380, %s381
        %s383 = smul.addr %s382, 8
        %s384 = scalar_lea.vmem %s2, %s383
        // Predicated region
        $region33: #{ibwdct.1} parent=27 // pred_check
          %p385 = pneg %p95
        $region34: #{ibwdct.1} parent=27 // pred_check_branch
          %387 = sbr.rel (%p385) target = $region36
        $region35: #{ibwdct.1} parent=27 // pred_region
          %s388 = smul.u32 2, %s19
        $region36: #{ibwdct.1} parent=27 // pred_fallthru
          _
      $region28: #{ibwdct.1} parent=5 // pred_fallthru
        _
      %p389 = scmp.le.s32.totalorder 2, %s9
      // Predicated region
      $region37: #{ibwdct.1} parent=5 // pred_check
        %p390 = pneg %p389
      $region38: #{ibwdct.1} parent=5 // pred_check_branch
        %392 = sbr.rel (%p390) target = $region40
      $region39: #{ibwdct.1} parent=5 // pred_region
        %s393 = ssub.s32 %s9, 2
        // Predicated region
        $region41: #{ibwdct.1} parent=39 // pred_check
          %p394 = pneg %p101
        $region42: #{ibwdct.1} parent=39 // pred_check_branch
          %396 = sbr.rel (%p394) target = $region44
        $region43: #{ibwdct.1} parent=39 // pred_region
          %s397 = smul.u32 2, %s21
          %p398 = scmp.lt.s32.totalorder %s20, 1
          %s399 = scalar_select %p398, %s20, 1
          %p400 = scmp.lt.s32.totalorder %s397, 1
          %s401 = scalar_select %p400, %s397, 1
          %s402 = smul.addr %s399, 16
          %s403 = sadd.s32 %s401, %s402
          %s404 = smul.addr %s403, 8
          %s405 = scalar_lea.vmem %s2, %s404
        $region44: #{ibwdct.1} parent=39 // pred_fallthru
          _
      $region40: #{ibwdct.1} parent=5 // pred_fallthru
        _
    $region6: #{ibwdct.1} parent=1 // loop_footer
      %s13 = sadd.s32 1, %s9
    $region7: #{ibwdct.1} parent=1 // loop_footer_branch
      %8 = sbr.rel target = $region3
    $region8: #{ibwdct.1} parent=1 // loop_exit
      _
    %406 = vsyncpa [#allocation3], 1
    %s407 = scalar_lea.sflag [#allocation3], 1
    %408 = vsyncpa %s407, 1

</llo_original>
